<compile_context>
chip_gen: v7x
topology: tpu7x:2x2x1
jax: 0.10.0
libtpu: 0.0.40
codegen_flags: <defaults>
</compile_context>

<pallas_src>
import functools

import jax
import jax.numpy as jnp
from jax.experimental import pallas as pl
from jax.experimental.pallas import tpu as pltpu


def _round_up(v, m):
    return (v + m - 1) // m * m


def lif_kernel(x_ref, h1_ref, r1_ref, steady_ref,
               v0_ref, isyn0_ref, irec0_ref, spk0_ref, cnt0_ref,
               spk_rec_ref, v_ref, isyn_ref, irec_ref, spk_ref, cnt_ref,
               *, alpha_syn, alpha_rec, alpha_v, dt_over_C, thr, Vr, refr):
    t = pl.program_id(0)

    # Load the initial state into the VMEM-resident output blocks once.
    @pl.when(t == 0)
    def _init():
        v_ref[...] = v0_ref[...]
        isyn_ref[...] = isyn0_ref[...]
        irec_ref[...] = irec0_ref[...]
        spk_ref[...] = spk0_ref[...]
        cnt_ref[...] = cnt0_ref[...]

    x = x_ref[0]                # (BS_P, NI_P) current-timestep input
    spk_old = spk_ref[...]      # (BS_P, N_P)  previous-step spikes

    # Feed-forward and recurrent injections (weights pre-scaled by their gains
    # in the wrapper, so each is a single MXU push).
    inj_ff = jnp.dot(x, h1_ref[...], preferred_element_type=jnp.float32)
    inj_rec = jnp.dot(spk_old, r1_ref[...], preferred_element_type=jnp.float32)

    # Leaky synaptic currents (alpha = 1 - dt/tau folded in the wrapper).
    i_syn = isyn_ref[...] * alpha_syn + inj_ff
    i_rec = irec_ref[...] * alpha_rec + inj_rec

    # Membrane potential update, clamp at 0.
    v = v_ref[...] * alpha_v + dt_over_C * (i_syn + i_rec + steady_ref[...])
    v = jnp.maximum(v, 0.0)

    # Spike = hard threshold (SurrGradSpike.forward).
    spk = (v - thr > 0.0).astype(jnp.float32)

    # Refractory counter and (count_refr <= 0)-gated reset.
    one_minus_spk = 1.0 - spk
    cnt = refr * spk + one_minus_spk * (cnt_ref[...] - 1.0)
    v = one_minus_spk * v * (cnt <= 0.0).astype(jnp.float32) + spk * Vr

    spk_rec_ref[0] = spk        # per-step spike record (module's return value)
    v_ref[...] = v
    isyn_ref[...] = i_syn
    irec_ref[...] = i_rec
    spk_ref[...] = spk
    cnt_ref[...] = cnt


def lif_neuron_run(x_seq, h1, r1, steady, V0, Isyn0, Irec0, spk0, cnt0, *, p):
    """Run T timesteps of LIF_neuron.forward in one pallas_call.

    x_seq: (T, bs, n_in) per-step inputs.
    Returns (spk_record[T, bs, n], (V, Isyn, Irec, spk, count_refr)).
    """
    T, bs, n_in = x_seq.shape
    n = V0.shape[1]

    BS_P = _round_up(bs, 8)
    N_P = _round_up(n, 128)
    NI_P = _round_up(n_in, 128)

    dt = p["clock_sim"]
    alpha_syn = 1.0 - dt / p["tau_Osc_Ie"]
    alpha_rec = 1.0 - dt / p["tau_Osc_Irec"]
    alpha_v = 1.0 - dt / p["tau_Osc"]
    dt_over_C = dt / p["C_Osc"]
    refr = p["refrac_Osc"] / dt

    pad2 = lambda a, r, c: jnp.pad(a, ((0, r - a.shape[0]), (0, c - a.shape[1])))

    # Pre-scaled, padded weights (built once, resident in VMEM across steps).
    # TODO(synk): tile r1 over N (extra grid axis) for n large enough that the
    # (N_P, N_P) recurrent weight no longer fits v7x's 64 MiB VMEM.
    h1_p = pad2(p["TDE_to_Osc_current"] * h1, NI_P, N_P)
    r1_p = pad2(p["gain_syn_rec"] * r1, N_P, N_P)

    x_p = jnp.pad(x_seq, ((0, 0), (0, BS_P - bs), (0, NI_P - n_in)))
    steady_p = pad2(steady, 1, N_P)
    V_p, Isyn_p, Irec_p, spk_p, cnt_p = (
        pad2(a, BS_P, N_P) for a in (V0, Isyn0, Irec0, spk0, cnt0))

    kernel = functools.partial(
        lif_kernel,
        alpha_syn=alpha_syn, alpha_rec=alpha_rec, alpha_v=alpha_v,
        dt_over_C=dt_over_C, thr=p["v_Osc_threshold"], Vr=p["reset_osc"],
        refr=refr)

    state_spec = pl.BlockSpec((BS_P, N_P), lambda t: (0, 0))
    out_shape = (
        jax.ShapeDtypeStruct((T, BS_P, N_P), jnp.float32),  # spike record
        *(jax.ShapeDtypeStruct((BS_P, N_P), jnp.float32) for _ in range(5)),
    )

    outs = pl.pallas_call(
        kernel,
        out_shape=out_shape,
        grid=(T,),
        in_specs=[
            pl.BlockSpec((1, BS_P, NI_P), lambda t: (t, 0, 0)),  # x[t]
            pl.BlockSpec((NI_P, N_P), lambda t: (0, 0)),         # gain*h1
            pl.BlockSpec((N_P, N_P), lambda t: (0, 0)),          # gain*r1
            pl.BlockSpec((1, N_P), lambda t: (0, 0)),            # steady
            state_spec, state_spec, state_spec, state_spec, state_spec,
        ],
        out_specs=(
            pl.BlockSpec((1, BS_P, N_P), lambda t: (t, 0, 0)),   # spikes[t]
            state_spec, state_spec, state_spec, state_spec, state_spec,
        ),
        compiler_params=pltpu.CompilerParams(
            dimension_semantics=("arbitrary",)),   # time is sequential
    )(x_p, h1_p, r1_p, steady_p, V_p, Isyn_p, Irec_p, spk_p, cnt_p)

    spk_rec, V, Isyn, Irec, spk, cnt = outs
    return (spk_rec[:, :bs, :n],
            (V[:bs, :n], Isyn[:bs, :n], Irec[:bs, :n],
             spk[:bs, :n], cnt[:bs, :n]))


def lif_reference(x_seq, h1, r1, steady, V, Isyn, Irec, spk, cnt, *, p):
    """Pure-JAX step loop mirroring the PyTorch module.

    Uses the algebraically identical folded form (a - dt*a/tau == a*(1-dt/tau))
    and pre-scaled weights so the comparison with the kernel is ulp-tight.
    """
    dt = p["clock_sim"]
    alpha_syn = 1.0 - dt / p["tau_Osc_Ie"]
    alpha_rec = 1.0 - dt / p["tau_Osc_Irec"]
    alpha_v = 1.0 - dt / p["tau_Osc"]
    dt_over_C = dt / p["C_Osc"]
    refr = p["refrac_Osc"] / dt
    thr, Vr = p["v_Osc_threshold"], p["reset_osc"]
    h1s = p["TDE_to_Osc_current"] * h1
    r1s = p["gain_syn_rec"] * r1

    spikes = []
    for t in range(x_seq.shape[0]):
        i_syn = Isyn * alpha_syn + x_seq[t] @ h1s
        i_rec = Irec * alpha_rec + spk @ r1s
        v = V * alpha_v + dt_over_C * (i_syn + i_rec + steady)
        v = jnp.maximum(v, 0.0)
        s = (v - thr > 0.0).astype(jnp.float32)
        c = refr * s + (1.0 - s) * (cnt - 1.0)
        v = (1.0 - s) * v * (c <= 0.0).astype(jnp.float32) + s * Vr
        V, Isyn, Irec, spk, cnt = v, i_syn, i_rec, s, c
        spikes.append(s)
    return jnp.stack(spikes), (V, Isyn, Irec, spk, cnt)


if __name__ == "__main__":
    # Deterministic parameters (mirrors the PyTorch module's __init__).
    # Gains are powers of two so the feed-forward / recurrent matmuls are
    # exact regardless of MXU precision mode -> kernel-vs-reference check is
    # robust across T timesteps of recurrent, thresholded dynamics.
    p = dict(
        C_Osc=1.0,
        v_Osc_threshold=1.0,
        trials_per_stimulus=2,   # bs
        neurons_n=32,            # n
        tau_Osc_Ie=0.01,
        tau_Osc_Irec=0.01,
        tau_Osc=0.02,
        TDE_to_Osc_current=2.0,  # gain_syn
        gain_syn_rec=0.125,
        clock_sim=0.001,
        reset_osc=0.0,
        I_minimum_osc=0.1,
        I_step_osc=0.01,
        refrac_Osc=0.002,
        n_in=16,
    )
    T = 32
    bs, n, n_in = p["trials_per_stimulus"], p["neurons_n"], p["n_in"]

    # train=False, recurrent=True  ->  h1 = ones(n_in, n), r1 = ones(n, n)
    h1 = jnp.ones((n_in, n), jnp.float32)
    r1 = jnp.ones((n, n), jnp.float32)
    steady = (p["I_minimum_osc"]
              + p["I_step_osc"] * jnp.arange(n, dtype=jnp.float32))[None, :]

    # Initial NeuronState (first forward call in PyTorch).
    V0 = jnp.ones((bs, n), jnp.float32)
    Isyn0 = jnp.zeros((bs, n), jnp.float32)
    Irec0 = jnp.zeros((bs, n), jnp.float32)
    spk0 = jnp.zeros((bs, n), jnp.float32)
    cnt0 = jnp.zeros((bs, n), jnp.float32)

    key = jax.random.PRNGKey(0)
    x_seq = jax.random.uniform(key, (T, bs, n_in), jnp.float32)
    # Snap inputs to the bf16 grid (still f32 arrays) so matmul results are
    # exactly representable -> the correctness check is precision-agnostic.
    x_seq = x_seq.astype(jnp.bfloat16).astype(jnp.float32)

    spk_rec, final_state = lif_neuron_run(
        x_seq, h1, r1, steady, V0, Isyn0, Irec0, spk0, cnt0, p=p)
    spk_rec = jax.block_until_ready(spk_rec)
    final_state = jax.block_until_ready(final_state)

    spk_ref, state_ref = lif_reference(
        x_seq, h1, r1, steady, V0, Isyn0, Irec0, spk0, cnt0, p=p)

    assert jnp.allclose(spk_rec, spk_ref, atol=1e-5, rtol=1e-5), "spike mismatch"
    for a, b in zip(final_state, state_ref):
        assert jnp.allclose(a, b, atol=1e-4, rtol=1e-4), "state mismatch"
    # The dynamics must actually exercise the threshold / refractory logic.
    assert float(spk_rec.sum()) > 0.0, "no spikes emitted"

    print("KERNEL_OK")
</pallas_src>

<mosaic_0001>
module attributes {stable_mosaic.version = 11 : i64} {
  func.func @lif_kernel(%arg0: i32, %arg1: memref<1x8x128xf32, #tpu.memory_space<vmem>>, %arg2: memref<128x128xf32, #tpu.memory_space<vmem>>, %arg3: memref<128x128xf32, #tpu.memory_space<vmem>>, %arg4: memref<1x128xf32, #tpu.memory_space<vmem>>, %arg5: memref<8x128xf32, #tpu.memory_space<vmem>>, %arg6: memref<8x128xf32, #tpu.memory_space<vmem>>, %arg7: memref<8x128xf32, #tpu.memory_space<vmem>>, %arg8: memref<8x128xf32, #tpu.memory_space<vmem>>, %arg9: memref<8x128xf32, #tpu.memory_space<vmem>>, %arg10: memref<1x8x128xf32, #tpu.memory_space<vmem>>, %arg11: memref<8x128xf32, #tpu.memory_space<vmem>>, %arg12: memref<8x128xf32, #tpu.memory_space<vmem>>, %arg13: memref<8x128xf32, #tpu.memory_space<vmem>>, %arg14: memref<8x128xf32, #tpu.memory_space<vmem>>, %arg15: memref<8x128xf32, #tpu.memory_space<vmem>>) attributes {dimension_semantics = [#tpu.dimension_semantics<arbitrary>], iteration_bounds = array<i64: 32>, scalar_prefetch = 0 : i64, scratch_operands = 0 : i64, tpu.core_type = #tpu.core_type<tc>, window_params = [{transform_indices = @transform_0, window_bounds = array<i64: 1, 8, 128>}, {pipeline_mode = #tpu.pipeline_mode<synchronous>, transform_indices = @transform_1, window_bounds = array<i64: 128, 128>}, {pipeline_mode = #tpu.pipeline_mode<synchronous>, transform_indices = @transform_2, window_bounds = array<i64: 128, 128>}, {pipeline_mode = #tpu.pipeline_mode<synchronous>, transform_indices = @transform_3, window_bounds = array<i64: 1, 128>}, {pipeline_mode = #tpu.pipeline_mode<synchronous>, transform_indices = @transform_4, window_bounds = array<i64: 8, 128>}, {pipeline_mode = #tpu.pipeline_mode<synchronous>, transform_indices = @transform_5, window_bounds = array<i64: 8, 128>}, {pipeline_mode = #tpu.pipeline_mode<synchronous>, transform_indices = @transform_6, window_bounds = array<i64: 8, 128>}, {pipeline_mode = #tpu.pipeline_mode<synchronous>, transform_indices = @transform_7, window_bounds = array<i64: 8, 128>}, {pipeline_mode = #tpu.pipeline_mode<synchronous>, transform_indices = @transform_8, window_bounds = array<i64: 8, 128>}, {transform_indices = @transform_9, window_bounds = array<i64: 1, 8, 128>}, {pipeline_mode = #tpu.pipeline_mode<synchronous>, transform_indices = @transform_10, window_bounds = array<i64: 8, 128>}, {pipeline_mode = #tpu.pipeline_mode<synchronous>, transform_indices = @transform_11, window_bounds = array<i64: 8, 128>}, {pipeline_mode = #tpu.pipeline_mode<synchronous>, transform_indices = @transform_12, window_bounds = array<i64: 8, 128>}, {pipeline_mode = #tpu.pipeline_mode<synchronous>, transform_indices = @transform_13, window_bounds = array<i64: 8, 128>}, {pipeline_mode = #tpu.pipeline_mode<synchronous>, transform_indices = @transform_14, window_bounds = array<i64: 8, 128>}]} {
    %c0_i32 = arith.constant 0 : i32
    %0 = arith.cmpi eq, %arg0, %c0_i32 : i32
    %1 = arith.extui %0 : i1 to i32
    %c0_i32_0 = arith.constant 0 : i32
    %2 = arith.cmpi ne, %1, %c0_i32_0 : i32
    scf.if %2 {
      %c0_45 = arith.constant 0 : index
      %c0_46 = arith.constant 0 : index
      %62 = vector.load %arg5[%c0_45, %c0_46] : memref<8x128xf32, #tpu.memory_space<vmem>>, vector<8x128xf32>
      %c0_47 = arith.constant 0 : index
      %c0_48 = arith.constant 0 : index
      %63 = vector.load %arg11[%c0_47, %c0_48] : memref<8x128xf32, #tpu.memory_space<vmem>>, vector<8x128xf32>
      tpu.vector_store %arg11[%c0_47, %c0_48], %62 {strides = array<i32>} : memref<8x128xf32, #tpu.memory_space<vmem>>, vector<8x128xf32>,
      %c0_49 = arith.constant 0 : index
      %c0_50 = arith.constant 0 : index
      %64 = vector.load %arg6[%c0_49, %c0_50] : memref<8x128xf32, #tpu.memory_space<vmem>>, vector<8x128xf32>
      %c0_51 = arith.constant 0 : index
      %c0_52 = arith.constant 0 : index
      %65 = vector.load %arg12[%c0_51, %c0_52] : memref<8x128xf32, #tpu.memory_space<vmem>>, vector<8x128xf32>
      tpu.vector_store %arg12[%c0_51, %c0_52], %64 {strides = array<i32>} : memref<8x128xf32, #tpu.memory_space<vmem>>, vector<8x128xf32>,
      %c0_53 = arith.constant 0 : index
      %c0_54 = arith.constant 0 : index
      %66 = vector.load %arg7[%c0_53, %c0_54] : memref<8x128xf32, #tpu.memory_space<vmem>>, vector<8x128xf32>
      %c0_55 = arith.constant 0 : index
      %c0_56 = arith.constant 0 : index
      %67 = vector.load %arg13[%c0_55, %c0_56] : memref<8x128xf32, #tpu.memory_space<vmem>>, vector<8x128xf32>
      tpu.vector_store %arg13[%c0_55, %c0_56], %66 {strides = array<i32>} : memref<8x128xf32, #tpu.memory_space<vmem>>, vector<8x128xf32>,
      %c0_57 = arith.constant 0 : index
      %c0_58 = arith.constant 0 : index
      %68 = vector.load %arg8[%c0_57, %c0_58] : memref<8x128xf32, #tpu.memory_space<vmem>>, vector<8x128xf32>
      %c0_59 = arith.constant 0 : index
      %c0_60 = arith.constant 0 : index
      %69 = vector.load %arg14[%c0_59, %c0_60] : memref<8x128xf32, #tpu.memory_space<vmem>>, vector<8x128xf32>
      tpu.vector_store %arg14[%c0_59, %c0_60], %68 {strides = array<i32>} : memref<8x128xf32, #tpu.memory_space<vmem>>, vector<8x128xf32>,
      %c0_61 = arith.constant 0 : index
      %c0_62 = arith.constant 0 : index
      %70 = vector.load %arg9[%c0_61, %c0_62] : memref<8x128xf32, #tpu.memory_space<vmem>>, vector<8x128xf32>
      %c0_63 = arith.constant 0 : index
      %c0_64 = arith.constant 0 : index
      %71 = vector.load %arg15[%c0_63, %c0_64] : memref<8x128xf32, #tpu.memory_space<vmem>>, vector<8x128xf32>
      tpu.vector_store %arg15[%c0_63, %c0_64], %70 {strides = array<i32>} : memref<8x128xf32, #tpu.memory_space<vmem>>, vector<8x128xf32>,
    } else {
    }
    %c0 = arith.constant 0 : index
    %c0_1 = arith.constant 0 : index
    %c0_2 = arith.constant 0 : index
    %3 = vector.load %arg1[%c0, %c0_1, %c0_2] : memref<1x8x128xf32, #tpu.memory_space<vmem>>, vector<1x8x128xf32>
    %4 = vector.shape_cast %3 : vector<1x8x128xf32> to vector<8x128xf32>
    %c0_3 = arith.constant 0 : index
    %c0_4 = arith.constant 0 : index
    %5 = vector.load %arg14[%c0_3, %c0_4] : memref<8x128xf32, #tpu.memory_space<vmem>>, vector<8x128xf32>
    %c0_5 = arith.constant 0 : index
    %c0_6 = arith.constant 0 : index
    %6 = vector.load %arg2[%c0_5, %c0_6] : memref<128x128xf32, #tpu.memory_space<vmem>>, vector<128x128xf32>
    %cst = arith.constant dense<0.000000e+00> : vector<8x128xf32>
    %7 = tpu.matmul %4, %6, %cst {dimension_numbers = #tpu.dot_dimension_numbers<[1], [0], [0], [1], [0, 0, 1, 1], [], []>} : vector<8x128xf32>, vector<128x128xf32>, vector<8x128xf32> -> vector<8x128xf32>
    %c0_7 = arith.constant 0 : index
    %c0_8 = arith.constant 0 : index
    %8 = vector.load %arg3[%c0_7, %c0_8] : memref<128x128xf32, #tpu.memory_space<vmem>>, vector<128x128xf32>
    %cst_9 = arith.constant dense<0.000000e+00> : vector<8x128xf32>
    %9 = tpu.matmul %5, %8, %cst_9 {dimension_numbers = #tpu.dot_dimension_numbers<[1], [0], [0], [1], [0, 0, 1, 1], [], []>} : vector<8x128xf32>, vector<128x128xf32>, vector<8x128xf32> -> vector<8x128xf32>
    %c0_10 = arith.constant 0 : index
    %c0_11 = arith.constant 0 : index
    %10 = vector.load %arg12[%c0_10, %c0_11] : memref<8x128xf32, #tpu.memory_space<vmem>>, vector<8x128xf32>
    %cst_12 = arith.constant 0.899999976 : f32
    %11 = vector.broadcast %cst_12 : f32 to vector<8x128xf32>
    %12 = arith.mulf %10, %11 : vector<8x128xf32>
    %13 = arith.addf %12, %7 : vector<8x128xf32>
    %c0_13 = arith.constant 0 : index
    %c0_14 = arith.constant 0 : index
    %14 = vector.load %arg13[%c0_13, %c0_14] : memref<8x128xf32, #tpu.memory_space<vmem>>, vector<8x128xf32>
    %cst_15 = arith.constant 0.899999976 : f32
    %15 = vector.broadcast %cst_15 : f32 to vector<8x128xf32>
    %16 = arith.mulf %14, %15 : vector<8x128xf32>
    %17 = arith.addf %16, %9 : vector<8x128xf32>
    %c0_16 = arith.constant 0 : index
    %c0_17 = arith.constant 0 : index
    %18 = vector.load %arg11[%c0_16, %c0_17] : memref<8x128xf32, #tpu.memory_space<vmem>>, vector<8x128xf32>
    %cst_18 = arith.constant 0.949999988 : f32
    %19 = vector.broadcast %cst_18 : f32 to vector<8x128xf32>
    %20 = arith.mulf %18, %19 : vector<8x128xf32>
    %21 = arith.addf %13, %17 : vector<8x128xf32>
    %c0_19 = arith.constant 0 : index
    %c0_20 = arith.constant 0 : index
    %22 = vector.load %arg4[%c0_19, %c0_20] : memref<1x128xf32, #tpu.memory_space<vmem>>, vector<1x128xf32>
    %23 = vector.broadcast %22 : vector<1x128xf32> to vector<8x128xf32>
    %24 = arith.addf %21, %23 : vector<8x128xf32>
    %cst_21 = arith.constant 1.000000e-03 : f32
    %25 = vector.broadcast %cst_21 : f32 to vector<8x128xf32>
    %26 = arith.mulf %25, %24 : vector<8x128xf32>
    %27 = arith.addf %20, %26 : vector<8x128xf32>
    %cst_22 = arith.constant 0.000000e+00 : f32
    %28 = vector.broadcast %cst_22 : f32 to vector<8x128xf32>
    %29 = arith.maximumf %27, %28 : vector<8x128xf32>
    %cst_23 = arith.constant 1.000000e+00 : f32
    %30 = vector.broadcast %cst_23 : f32 to vector<8x128xf32>
    %31 = arith.subf %29, %30 : vector<8x128xf32>
    %cst_24 = arith.constant 0.000000e+00 : f32
    %32 = vector.broadcast %cst_24 : f32 to vector<8x128xf32>
    %33 = arith.cmpf ogt, %31, %32 : vector<8x128xf32>
    %34 = arith.extui %33 : vector<8x128xi1> to vector<8x128xi32>
    %35 = arith.sitofp %34 : vector<8x128xi32> to vector<8x128xf32>
    %cst_25 = arith.constant 1.000000e+00 : f32
    %36 = vector.broadcast %cst_25 : f32 to vector<8x128xf32>
    %37 = arith.subf %36, %35 : vector<8x128xf32>
    %cst_26 = arith.constant 2.000000e+00 : f32
    %38 = vector.broadcast %cst_26 : f32 to vector<8x128xf32>
    %39 = arith.mulf %38, %35 : vector<8x128xf32>
    %c0_27 = arith.constant 0 : index
    %c0_28 = arith.constant 0 : index
    %40 = vector.load %arg15[%c0_27, %c0_28] : memref<8x128xf32, #tpu.memory_space<vmem>>, vector<8x128xf32>
    %cst_29 = arith.constant 1.000000e+00 : f32
    %41 = vector.broadcast %cst_29 : f32 to vector<8x128xf32>
    %42 = arith.subf %40, %41 : vector<8x128xf32>
    %43 = arith.mulf %37, %42 : vector<8x128xf32>
    %44 = arith.addf %39, %43 : vector<8x128xf32>
    %45 = arith.mulf %37, %29 : vector<8x128xf32>
    %cst_30 = arith.constant 0.000000e+00 : f32
    %46 = vector.broadcast %cst_30 : f32 to vector<8x128xf32>
    %47 = arith.cmpf ole, %44, %46 : vector<8x128xf32>
    %48 = arith.extui %47 : vector<8x128xi1> to vector<8x128xi32>
    %49 = arith.sitofp %48 : vector<8x128xi32> to vector<8x128xf32>
    %50 = arith.mulf %45, %49 : vector<8x128xf32>
    %cst_31 = arith.constant 0.000000e+00 : f32
    %51 = vector.broadcast %cst_31 : f32 to vector<8x128xf32>
    %52 = arith.mulf %35, %51 : vector<8x128xf32>
    %53 = arith.addf %50, %52 : vector<8x128xf32>
    %c0_32 = arith.constant 0 : index
    %c0_33 = arith.constant 0 : index
    %c0_34 = arith.constant 0 : index
    %54 = vector.load %arg10[%c0_32, %c0_33, %c0_34] : memref<1x8x128xf32, #tpu.memory_space<vmem>>, vector<1x8x128xf32>
    %55 = vector.shape_cast %54 : vector<1x8x128xf32> to vector<8x128xf32>
    %56 = vector.shape_cast %35 : vector<8x128xf32> to vector<1x8x128xf32>
    tpu.vector_store %arg10[%c0_32, %c0_33, %c0_34], %56 {strides = array<i32>} : memref<1x8x128xf32, #tpu.memory_space<vmem>>, vector<1x8x128xf32>,
    %c0_35 = arith.constant 0 : index
    %c0_36 = arith.constant 0 : index
    %57 = vector.load %arg11[%c0_35, %c0_36] : memref<8x128xf32, #tpu.memory_space<vmem>>, vector<8x128xf32>
    tpu.vector_store %arg11[%c0_35, %c0_36], %53 {strides = array<i32>} : memref<8x128xf32, #tpu.memory_space<vmem>>, vector<8x128xf32>,
    %c0_37 = arith.constant 0 : index
    %c0_38 = arith.constant 0 : index
    %58 = vector.load %arg12[%c0_37, %c0_38] : memref<8x128xf32, #tpu.memory_space<vmem>>, vector<8x128xf32>
    tpu.vector_store %arg12[%c0_37, %c0_38], %13 {strides = array<i32>} : memref<8x128xf32, #tpu.memory_space<vmem>>, vector<8x128xf32>,
    %c0_39 = arith.constant 0 : index
    %c0_40 = arith.constant 0 : index
    %59 = vector.load %arg13[%c0_39, %c0_40] : memref<8x128xf32, #tpu.memory_space<vmem>>, vector<8x128xf32>
    tpu.vector_store %arg13[%c0_39, %c0_40], %17 {strides = array<i32>} : memref<8x128xf32, #tpu.memory_space<vmem>>, vector<8x128xf32>,
    %c0_41 = arith.constant 0 : index
    %c0_42 = arith.constant 0 : index
    %60 = vector.load %arg14[%c0_41, %c0_42] : memref<8x128xf32, #tpu.memory_space<vmem>>, vector<8x128xf32>
    tpu.vector_store %arg14[%c0_41, %c0_42], %35 {strides = array<i32>} : memref<8x128xf32, #tpu.memory_space<vmem>>, vector<8x128xf32>,
    %c0_43 = arith.constant 0 : index
    %c0_44 = arith.constant 0 : index
    %61 = vector.load %arg15[%c0_43, %c0_44] : memref<8x128xf32, #tpu.memory_space<vmem>>, vector<8x128xf32>
    tpu.vector_store %arg15[%c0_43, %c0_44], %44 {strides = array<i32>} : memref<8x128xf32, #tpu.memory_space<vmem>>, vector<8x128xf32>,
    return
  }
  func.func @transform_0(%arg0: i32) -> (i32, i32, i32) {
    %c0_i32 = arith.constant 0 : i32
    %c0_i32_0 = arith.constant 0 : i32
    %c0_i32_1 = arith.constant 0 : i32
    return %arg0, %c0_i32, %c0_i32_0 : i32, i32, i32
  }
  func.func @transform_1(%arg0: i32) -> (i32, i32) {
    %c0_i32 = arith.constant 0 : i32
    %c0_i32_0 = arith.constant 0 : i32
    %c0_i32_1 = arith.constant 0 : i32
    return %c0_i32, %c0_i32_0 : i32, i32
  }
  func.func @transform_2(%arg0: i32) -> (i32, i32) {
    %c0_i32 = arith.constant 0 : i32
    %c0_i32_0 = arith.constant 0 : i32
    %c0_i32_1 = arith.constant 0 : i32
    return %c0_i32, %c0_i32_0 : i32, i32
  }
  func.func @transform_3(%arg0: i32) -> (i32, i32) {
    %c0_i32 = arith.constant 0 : i32
    %c0_i32_0 = arith.constant 0 : i32
    %c0_i32_1 = arith.constant 0 : i32
    return %c0_i32, %c0_i32_0 : i32, i32
  }
  func.func @transform_4(%arg0: i32) -> (i32, i32) {
    %c0_i32 = arith.constant 0 : i32
    %c0_i32_0 = arith.constant 0 : i32
    %c0_i32_1 = arith.constant 0 : i32
    return %c0_i32, %c0_i32_0 : i32, i32
  }
  func.func @transform_5(%arg0: i32) -> (i32, i32) {
    %c0_i32 = arith.constant 0 : i32
    %c0_i32_0 = arith.constant 0 : i32
    %c0_i32_1 = arith.constant 0 : i32
    return %c0_i32, %c0_i32_0 : i32, i32
  }
  func.func @transform_6(%arg0: i32) -> (i32, i32) {
    %c0_i32 = arith.constant 0 : i32
    %c0_i32_0 = arith.constant 0 : i32
    %c0_i32_1 = arith.constant 0 : i32
    return %c0_i32, %c0_i32_0 : i32, i32
  }
  func.func @transform_7(%arg0: i32) -> (i32, i32) {
    %c0_i32 = arith.constant 0 : i32
    %c0_i32_0 = arith.constant 0 : i32
    %c0_i32_1 = arith.constant 0 : i32
    return %c0_i32, %c0_i32_0 : i32, i32
  }
  func.func @transform_8(%arg0: i32) -> (i32, i32) {
    %c0_i32 = arith.constant 0 : i32
    %c0_i32_0 = arith.constant 0 : i32
    %c0_i32_1 = arith.constant 0 : i32
    return %c0_i32, %c0_i32_0 : i32, i32
  }
  func.func @transform_9(%arg0: i32) -> (i32, i32, i32) {
    %c0_i32 = arith.constant 0 : i32
    %c0_i32_0 = arith.constant 0 : i32
    %c0_i32_1 = arith.constant 0 : i32
    return %arg0, %c0_i32, %c0_i32_0 : i32, i32, i32
  }
  func.func @transform_10(%arg0: i32) -> (i32, i32) {
    %c0_i32 = arith.constant 0 : i32
    %c0_i32_0 = arith.constant 0 : i32
    %c0_i32_1 = arith.constant 0 : i32
    return %c0_i32, %c0_i32_0 : i32, i32
  }
  func.func @transform_11(%arg0: i32) -> (i32, i32) {
    %c0_i32 = arith.constant 0 : i32
    %c0_i32_0 = arith.constant 0 : i32
    %c0_i32_1 = arith.constant 0 : i32
    return %c0_i32, %c0_i32_0 : i32, i32
  }
  func.func @transform_12(%arg0: i32) -> (i32, i32) {
    %c0_i32 = arith.constant 0 : i32
    %c0_i32_0 = arith.constant 0 : i32
    %c0_i32_1 = arith.constant 0 : i32
    return %c0_i32, %c0_i32_0 : i32, i32
  }
  func.func @transform_13(%arg0: i32) -> (i32, i32) {
    %c0_i32 = arith.constant 0 : i32
    %c0_i32_0 = arith.constant 0 : i32
    %c0_i32_1 = arith.constant 0 : i32
    return %c0_i32, %c0_i32_0 : i32, i32
  }
  func.func @transform_14(%arg0: i32) -> (i32, i32) {
    %c0_i32 = arith.constant 0 : i32
    %c0_i32_0 = arith.constant 0 : i32
    %c0_i32_1 = arith.constant 0 : i32
    return %c0_i32, %c0_i32_0 : i32, i32
  }
}

</mosaic_0001>

<llo_original>
// kernel: tpu_custom_call.1
$region0: #{tpu_custom_call.1}
  #allocation0 [shape = 'u32[]', space=smem, size = 0x4, offset = 0x4, fixed_abs, tag = 'smem constant byte address 0x4 - core index']
  #allocation1 [shape = 'u32[144,128]{1,0:T(1,128)}', space=vmem, size = 0x12000, scoped, tag = 'internal scratch']
  %s0 = inlined_call_operand.hbm [shape: f32[32,8,128], index: 0, kind: input, shape index: {}]
  %s1 = inlined_call_operand.hbm [shape: f32[128,128], index: 1, kind: input, shape index: {}]
  %s2 = inlined_call_operand.hbm [shape: f32[128,128], index: 2, kind: input, shape index: {}]
  %s3 = inlined_call_operand.vmem [shape: f32[1,128], index: 3, kind: input, shape index: {}]
  %s4 = inlined_call_operand.vmem [shape: f32[8,128], index: 4, kind: input, shape index: {}]
  %s5 = inlined_call_operand.vmem [shape: f32[8,128], index: 5, kind: input, shape index: {}]
  %s6 = inlined_call_operand.hbm [shape: f32[8,128], index: 6, kind: input, shape index: {}]
  %s7 = inlined_call_operand.vmem [shape: f32[8,128], index: 7, kind: input, shape index: {}]
  %s8 = inlined_call_operand.hbm [shape: f32[8,128], index: 8, kind: input, shape index: {}]
  %s9 = inlined_call_operand.hbm [shape: f32[32,8,128], index: 9, kind: output, shape index: {0}]
  %s10 = inlined_call_operand.hbm [shape: f32[8,128], index: 10, kind: output, shape index: {1}]
  %s11 = inlined_call_operand.hbm [shape: f32[8,128], index: 11, kind: output, shape index: {2}]
  %s12 = inlined_call_operand.hbm [shape: f32[8,128], index: 12, kind: output, shape index: {3}]
  %s13 = inlined_call_operand.hbm [shape: f32[8,128], index: 13, kind: output, shape index: {4}]
  %s14 = inlined_call_operand.hbm [shape: f32[8,128], index: 14, kind: output, shape index: {5}]
  %15 = xla_tuple %s9, %s10, %s11, %s12, %s13, %s14
  %s16 = sld [smem:[#allocation0]]
  $region133: #{tpu_custom_call.1} parent=0
    _
  %s18 = ssub.s32 1, %s16
  %s19 = scalar_select 0, %s18, %s16
  $region1: #{tpu_custom_call.1} parent=0
    #allocation2 [shape = 'u8[8192]{0}', space=vmem, size = 0x2000, scoped, tag = 'input window, operand 0']
    #allocation3 [shape = 's32[2]{0}', space=sflag, size = 0x8, scoped, tag = 'scoped memory for tpu_custom_call.1']
    #allocation4 [shape = 's32[2]{0}', space=sflag, size = 0x8, scoped, tag = 'scoped memory for tpu_custom_call.1']
    #allocation5 [shape = 'u8[65536]{0}', space=vmem, size = 0x10000, scoped, tag = 'input window, operand 1, single buffered']
    #allocation6 [shape = 's32[1]{0}', space=sflag, size = 0x4, scoped, tag = 'scoped memory for tpu_custom_call.1']
    #allocation7 [shape = 'u8[65536]{0}', space=vmem, size = 0x10000, scoped, tag = 'input window, operand 2, single buffered']
    #allocation8 [shape = 'u8[4096]{0}', space=vmem, size = 0x1000, scoped, tag = 'input window, operand 6, single buffered']
    #allocation9 [shape = 's32[1]{0}', space=sflag, size = 0x4, scoped, tag = 'scoped memory for tpu_custom_call.1']
    #allocation10 [shape = 'u8[4096]{0}', space=vmem, size = 0x1000, scoped, tag = 'input window, operand 8, single buffered']
    #allocation11 [shape = 'u8[8192]{0}', space=vmem, size = 0x2000, scoped, tag = 'output window, operand 0']
    #allocation12 [shape = 'u8[4096]{0}', space=vmem, size = 0x1000, scoped, tag = 'output window, operand 1, single buffered']
    #allocation13 [shape = 's32[1]{0}', space=sflag, size = 0x4, scoped, tag = 'scoped memory for tpu_custom_call.1']
    #allocation14 [shape = 'u8[4096]{0}', space=vmem, size = 0x1000, scoped, tag = 'output window, operand 2, single buffered']
    #allocation15 [shape = 'u8[4096]{0}', space=vmem, size = 0x1000, scoped, tag = 'output window, operand 3, single buffered']
    #allocation16 [shape = 's32[1]{0}', space=sflag, size = 0x4, scoped, tag = 'scoped memory for tpu_custom_call.1']
    #allocation17 [shape = 'u8[4096]{0}', space=vmem, size = 0x1000, scoped, tag = 'output window, operand 4, single buffered']
    #allocation18 [shape = 'u8[4096]{0}', space=vmem, size = 0x1000, scoped, tag = 'output window, operand 5, single buffered']
    #allocation19 [shape = 's32[1]{0}', space=sflag, size = 0x4, scoped, tag = 'scoped memory for tpu_custom_call.1']
    %20 = vsyncpa [#allocation3], 0
    %s21 = scalar_lea.sflag [#allocation3], 1
    %22 = vsyncpa %s21, 0
    %23 = vsyncpa [#allocation6], 0
    %24 = vsyncpa [#allocation9], 0
    %25 = vsyncpa [#allocation4], 0
    %s26 = scalar_lea.sflag [#allocation4], 1
    %27 = vsyncpa %s26, 0
    %28 = vsyncpa [#allocation13], 0
    %29 = vsyncpa [#allocation16], 0
    %30 = vsyncpa [#allocation19], 0
    loop: start=0, step=1, limit=34
    $region2: #{tpu_custom_call.1} parent=1 // loop_pre_header
      _
    $region3: #{tpu_custom_call.1} parent=1 // loop_header
      %s32 = sphi 0, %s36
      %p33 = scmp.ge.s32.totalorder %s32, 34
      %s42 = sphi 0, %s44
      %s45 = sphi 0, %s42
      %s46 = sphi 0, %s45
      %s62 = sphi 0, %s46
      %s66 = sphi 0, %s66
      %s68 = sphi 0, %s66
      %s69 = sphi 0, %s68
      %s83 = sphi 0, %s69
      %s87 = sphi 0, %s87
      %s89 = sphi 0, %s87
      %s90 = sphi 0, %s89
      %s104 = sphi 0, %s90
      %s108 = sphi 0, %s108
      %s110 = sphi 0, %s108
      %s111 = sphi 0, %s110
      %s125 = sphi 0, %s111
      %s129 = sphi 0, %s129
      %s131 = sphi 0, %s129
      %s132 = sphi 0, %s131
      %s146 = sphi 0, %s132
      %s150 = sphi 0, %s150
      %s152 = sphi 0, %s150
      %s153 = sphi 0, %s152
      %s167 = sphi 0, %s153
      %s171 = sphi 0, %s171
      %s173 = sphi 0, %s171
      %s174 = sphi 0, %s173
      %s188 = sphi 0, %s174
      %s192 = sphi 0, %s192
      %s194 = sphi 0, %s192
      %s195 = sphi 0, %s194
      %s209 = sphi 0, %s195
      %s213 = sphi 0, %s213
      %s215 = sphi 0, %s213
      %s216 = sphi 0, %s215
      %s230 = sphi 0, %s216
      %s236 = sphi 0, %s238
      %s239 = sphi 0, %s236
      %s240 = sphi 0, %s239
      %s256 = sphi 0, %s240
      %s260 = sphi 0, %s260
      %s262 = sphi 0, %s260
      %s263 = sphi 0, %s262
      %s277 = sphi 0, %s263
      %s281 = sphi 0, %s281
      %s283 = sphi 0, %s281
      %s284 = sphi 0, %s283
      %s298 = sphi 0, %s284
      %s302 = sphi 0, %s302
      %s304 = sphi 0, %s302
      %s305 = sphi 0, %s304
      %s319 = sphi 0, %s305
      %s323 = sphi 0, %s323
      %s325 = sphi 0, %s323
      %s326 = sphi 0, %s325
      %s340 = sphi 0, %s326
      %s344 = sphi 0, %s344
      %s346 = sphi 0, %s344
      %s347 = sphi 0, %s346
      %s361 = sphi 0, %s347
    $region4: #{tpu_custom_call.1} parent=1 // loop_header_branch
      %35 = sbr.rel (%p33) target = $region8
    $region5: #{tpu_custom_call.1} parent=1 // loop_body
      %s37 = ssub.s32 %s32, 1
      %s38 = ssub.s32 %s32, 2
      %s39 = sadd.s32 %s32, 1
      %s40 = ssub.s32 %s32, %s39
      %p41 = scmp.eq.s32.totalorder %s40, 0
      %s43 = sadd.s32 %s42, 1
      %s44 = scalar_select %p41, %s42, %s43
      %p47 = pneg %p41
      %p48 = scmp.eq.s32.totalorder %s32, 31
      %p49 = por %p47, %p48
      %p50 = scmp.ne.s32.totalorder %s42, %s45
      %p51 = scmp.eq.s32.totalorder %s32, 0
      %p52 = por %p50, %p51
      %p53 = scmp.ne.s32.totalorder %s42, %s45
      %p54 = scmp.eq.s32.totalorder %s37, 31
      %p55 = por %p53, %p54
      %p56 = scmp.ne.s32.totalorder %s45, %s46
      %p57 = scmp.eq.s32.totalorder %s37, 0
      %p58 = por %p56, %p57
      %p59 = scmp.ne.s32.totalorder %s45, %s46
      %p60 = scmp.eq.s32.totalorder %s38, 31
      %p61 = por %p59, %p60
      %p63 = scmp.ne.s32.totalorder %s46, %s62
      %p64 = scmp.eq.s32.totalorder %s38, 0
      %p65 = por %p63, %p64
      %s67 = sadd.s32 %s66, 1
      %p70 = scmp.eq.s32.totalorder %s32, 31
      %p71 = scmp.ne.s32.totalorder %s66, %s68
      %p72 = scmp.eq.s32.totalorder %s32, 0
      %p73 = por %p71, %p72
      %p74 = scmp.ne.s32.totalorder %s66, %s68
      %p75 = scmp.eq.s32.totalorder %s37, 31
      %p76 = por %p74, %p75
      %p77 = scmp.ne.s32.totalorder %s68, %s69
      %p78 = scmp.eq.s32.totalorder %s37, 0
      %p79 = por %p77, %p78
      %p80 = scmp.ne.s32.totalorder %s68, %s69
      %p81 = scmp.eq.s32.totalorder %s38, 31
      %p82 = por %p80, %p81
      %p84 = scmp.ne.s32.totalorder %s69, %s83
      %p85 = scmp.eq.s32.totalorder %s38, 0
      %p86 = por %p84, %p85
      %s88 = sadd.s32 %s87, 1
      %p91 = scmp.eq.s32.totalorder %s32, 31
      %p92 = scmp.ne.s32.totalorder %s87, %s89
      %p93 = scmp.eq.s32.totalorder %s32, 0
      %p94 = por %p92, %p93
      %p95 = scmp.ne.s32.totalorder %s87, %s89
      %p96 = scmp.eq.s32.totalorder %s37, 31
      %p97 = por %p95, %p96
      %p98 = scmp.ne.s32.totalorder %s89, %s90
      %p99 = scmp.eq.s32.totalorder %s37, 0
      %p100 = por %p98, %p99
      %p101 = scmp.ne.s32.totalorder %s89, %s90
      %p102 = scmp.eq.s32.totalorder %s38, 31
      %p103 = por %p101, %p102
      %p105 = scmp.ne.s32.totalorder %s90, %s104
      %p106 = scmp.eq.s32.totalorder %s38, 0
      %p107 = por %p105, %p106
      %s109 = sadd.s32 %s108, 1
      %p112 = scmp.eq.s32.totalorder %s32, 31
      %p113 = scmp.ne.s32.totalorder %s108, %s110
      %p114 = scmp.eq.s32.totalorder %s32, 0
      %p115 = por %p113, %p114
      %p116 = scmp.ne.s32.totalorder %s108, %s110
      %p117 = scmp.eq.s32.totalorder %s37, 31
      %p118 = por %p116, %p117
      %p119 = scmp.ne.s32.totalorder %s110, %s111
      %p120 = scmp.eq.s32.totalorder %s37, 0
      %p121 = por %p119, %p120
      %p122 = scmp.ne.s32.totalorder %s110, %s111
      %p123 = scmp.eq.s32.totalorder %s38, 31
      %p124 = por %p122, %p123
      %p126 = scmp.ne.s32.totalorder %s111, %s125
      %p127 = scmp.eq.s32.totalorder %s38, 0
      %p128 = por %p126, %p127
      %s130 = sadd.s32 %s129, 1
      %p133 = scmp.eq.s32.totalorder %s32, 31
      %p134 = scmp.ne.s32.totalorder %s129, %s131
      %p135 = scmp.eq.s32.totalorder %s32, 0
      %p136 = por %p134, %p135
      %p137 = scmp.ne.s32.totalorder %s129, %s131
      %p138 = scmp.eq.s32.totalorder %s37, 31
      %p139 = por %p137, %p138
      %p140 = scmp.ne.s32.totalorder %s131, %s132
      %p141 = scmp.eq.s32.totalorder %s37, 0
      %p142 = por %p140, %p141
      %p143 = scmp.ne.s32.totalorder %s131, %s132
      %p144 = scmp.eq.s32.totalorder %s38, 31
      %p145 = por %p143, %p144
      %p147 = scmp.ne.s32.totalorder %s132, %s146
      %p148 = scmp.eq.s32.totalorder %s38, 0
      %p149 = por %p147, %p148
      %s151 = sadd.s32 %s150, 1
      %p154 = scmp.eq.s32.totalorder %s32, 31
      %p155 = scmp.ne.s32.totalorder %s150, %s152
      %p156 = scmp.eq.s32.totalorder %s32, 0
      %p157 = por %p155, %p156
      %p158 = scmp.ne.s32.totalorder %s150, %s152
      %p159 = scmp.eq.s32.totalorder %s37, 31
      %p160 = por %p158, %p159
      %p161 = scmp.ne.s32.totalorder %s152, %s153
      %p162 = scmp.eq.s32.totalorder %s37, 0
      %p163 = por %p161, %p162
      %p164 = scmp.ne.s32.totalorder %s152, %s153
      %p165 = scmp.eq.s32.totalorder %s38, 31
      %p166 = por %p164, %p165
      %p168 = scmp.ne.s32.totalorder %s153, %s167
      %p169 = scmp.eq.s32.totalorder %s38, 0
      %p170 = por %p168, %p169
      %s172 = sadd.s32 %s171, 1
      %p175 = scmp.eq.s32.totalorder %s32, 31
      %p176 = scmp.ne.s32.totalorder %s171, %s173
      %p177 = scmp.eq.s32.totalorder %s32, 0
      %p178 = por %p176, %p177
      %p179 = scmp.ne.s32.totalorder %s171, %s173
      %p180 = scmp.eq.s32.totalorder %s37, 31
      %p181 = por %p179, %p180
      %p182 = scmp.ne.s32.totalorder %s173, %s174
      %p183 = scmp.eq.s32.totalorder %s37, 0
      %p184 = por %p182, %p183
      %p185 = scmp.ne.s32.totalorder %s173, %s174
      %p186 = scmp.eq.s32.totalorder %s38, 31
      %p187 = por %p185, %p186
      %p189 = scmp.ne.s32.totalorder %s174, %s188
      %p190 = scmp.eq.s32.totalorder %s38, 0
      %p191 = por %p189, %p190
      %s193 = sadd.s32 %s192, 1
      %p196 = scmp.eq.s32.totalorder %s32, 31
      %p197 = scmp.ne.s32.totalorder %s192, %s194
      %p198 = scmp.eq.s32.totalorder %s32, 0
      %p199 = por %p197, %p198
      %p200 = scmp.ne.s32.totalorder %s192, %s194
      %p201 = scmp.eq.s32.totalorder %s37, 31
      %p202 = por %p200, %p201
      %p203 = scmp.ne.s32.totalorder %s194, %s195
      %p204 = scmp.eq.s32.totalorder %s37, 0
      %p205 = por %p203, %p204
      %p206 = scmp.ne.s32.totalorder %s194, %s195
      %p207 = scmp.eq.s32.totalorder %s38, 31
      %p208 = por %p206, %p207
      %p210 = scmp.ne.s32.totalorder %s195, %s209
      %p211 = scmp.eq.s32.totalorder %s38, 0
      %p212 = por %p210, %p211
      %s214 = sadd.s32 %s213, 1
      %p217 = scmp.eq.s32.totalorder %s32, 31
      %p218 = scmp.ne.s32.totalorder %s213, %s215
      %p219 = scmp.eq.s32.totalorder %s32, 0
      %p220 = por %p218, %p219
      %p221 = scmp.ne.s32.totalorder %s213, %s215
      %p222 = scmp.eq.s32.totalorder %s37, 31
      %p223 = por %p221, %p222
      %p224 = scmp.ne.s32.totalorder %s215, %s216
      %p225 = scmp.eq.s32.totalorder %s37, 0
      %p226 = por %p224, %p225
      %p227 = scmp.ne.s32.totalorder %s215, %s216
      %p228 = scmp.eq.s32.totalorder %s38, 31
      %p229 = por %p227, %p228
      %p231 = scmp.ne.s32.totalorder %s216, %s230
      %p232 = scmp.eq.s32.totalorder %s38, 0
      %p233 = por %p231, %p232
      %s234 = ssub.s32 %s32, %s39
      %p235 = scmp.eq.s32.totalorder %s234, 0
      %s237 = sadd.s32 %s236, 1
      %s238 = scalar_select %p235, %s236, %s237
      %p241 = pneg %p235
      %p242 = scmp.eq.s32.totalorder %s32, 31
      %p243 = por %p241, %p242
      %p244 = scmp.ne.s32.totalorder %s236, %s239
      %p245 = scmp.eq.s32.totalorder %s32, 0
      %p246 = por %p244, %p245
      %p247 = scmp.ne.s32.totalorder %s236, %s239
      %p248 = scmp.eq.s32.totalorder %s37, 31
      %p249 = por %p247, %p248
      %p250 = scmp.ne.s32.totalorder %s239, %s240
      %p251 = scmp.eq.s32.totalorder %s37, 0
      %p252 = por %p250, %p251
      %p253 = scmp.ne.s32.totalorder %s239, %s240
      %p254 = scmp.eq.s32.totalorder %s38, 31
      %p255 = por %p253, %p254
      %p257 = scmp.ne.s32.totalorder %s240, %s256
      %p258 = scmp.eq.s32.totalorder %s38, 0
      %p259 = por %p257, %p258
      %s261 = sadd.s32 %s260, 1
      %p264 = scmp.eq.s32.totalorder %s32, 31
      %p265 = scmp.ne.s32.totalorder %s260, %s262
      %p266 = scmp.eq.s32.totalorder %s32, 0
      %p267 = por %p265, %p266
      %p268 = scmp.ne.s32.totalorder %s260, %s262
      %p269 = scmp.eq.s32.totalorder %s37, 31
      %p270 = por %p268, %p269
      %p271 = scmp.ne.s32.totalorder %s262, %s263
      %p272 = scmp.eq.s32.totalorder %s37, 0
      %p273 = por %p271, %p272
      %p274 = scmp.ne.s32.totalorder %s262, %s263
      %p275 = scmp.eq.s32.totalorder %s38, 31
      %p276 = por %p274, %p275
      %p278 = scmp.ne.s32.totalorder %s263, %s277
      %p279 = scmp.eq.s32.totalorder %s38, 0
      %p280 = por %p278, %p279
      %s282 = sadd.s32 %s281, 1
      %p285 = scmp.eq.s32.totalorder %s32, 31
      %p286 = scmp.ne.s32.totalorder %s281, %s283
      %p287 = scmp.eq.s32.totalorder %s32, 0
      %p288 = por %p286, %p287
      %p289 = scmp.ne.s32.totalorder %s281, %s283
      %p290 = scmp.eq.s32.totalorder %s37, 31
      %p291 = por %p289, %p290
      %p292 = scmp.ne.s32.totalorder %s283, %s284
      %p293 = scmp.eq.s32.totalorder %s37, 0
      %p294 = por %p292, %p293
      %p295 = scmp.ne.s32.totalorder %s283, %s284
      %p296 = scmp.eq.s32.totalorder %s38, 31
      %p297 = por %p295, %p296
      %p299 = scmp.ne.s32.totalorder %s284, %s298
      %p300 = scmp.eq.s32.totalorder %s38, 0
      %p301 = por %p299, %p300
      %s303 = sadd.s32 %s302, 1
      %p306 = scmp.eq.s32.totalorder %s32, 31
      %p307 = scmp.ne.s32.totalorder %s302, %s304
      %p308 = scmp.eq.s32.totalorder %s32, 0
      %p309 = por %p307, %p308
      %p310 = scmp.ne.s32.totalorder %s302, %s304
      %p311 = scmp.eq.s32.totalorder %s37, 31
      %p312 = por %p310, %p311
      %p313 = scmp.ne.s32.totalorder %s304, %s305
      %p314 = scmp.eq.s32.totalorder %s37, 0
      %p315 = por %p313, %p314
      %p316 = scmp.ne.s32.totalorder %s304, %s305
      %p317 = scmp.eq.s32.totalorder %s38, 31
      %p318 = por %p316, %p317
      %p320 = scmp.ne.s32.totalorder %s305, %s319
      %p321 = scmp.eq.s32.totalorder %s38, 0
      %p322 = por %p320, %p321
      %s324 = sadd.s32 %s323, 1
      %p327 = scmp.eq.s32.totalorder %s32, 31
      %p328 = scmp.ne.s32.totalorder %s323, %s325
      %p329 = scmp.eq.s32.totalorder %s32, 0
      %p330 = por %p328, %p329
      %p331 = scmp.ne.s32.totalorder %s323, %s325
      %p332 = scmp.eq.s32.totalorder %s37, 31
      %p333 = por %p331, %p332
      %p334 = scmp.ne.s32.totalorder %s325, %s326
      %p335 = scmp.eq.s32.totalorder %s37, 0
      %p336 = por %p334, %p335
      %p337 = scmp.ne.s32.totalorder %s325, %s326
      %p338 = scmp.eq.s32.totalorder %s38, 31
      %p339 = por %p337, %p338
      %p341 = scmp.ne.s32.totalorder %s326, %s340
      %p342 = scmp.eq.s32.totalorder %s38, 0
      %p343 = por %p341, %p342
      %s345 = sadd.s32 %s344, 1
      %p348 = scmp.eq.s32.totalorder %s32, 31
      %p349 = scmp.ne.s32.totalorder %s344, %s346
      %p350 = scmp.eq.s32.totalorder %s32, 0
      %p351 = por %p349, %p350
      %p352 = scmp.ne.s32.totalorder %s344, %s346
      %p353 = scmp.eq.s32.totalorder %s37, 31
      %p354 = por %p352, %p353
      %p355 = scmp.ne.s32.totalorder %s346, %s347
      %p356 = scmp.eq.s32.totalorder %s37, 0
      %p357 = por %p355, %p356
      %p358 = scmp.ne.s32.totalorder %s346, %s347
      %p359 = scmp.eq.s32.totalorder %s38, 31
      %p360 = por %p358, %p359
      %p362 = scmp.ne.s32.totalorder %s347, %s361
      %p363 = scmp.eq.s32.totalorder %s38, 0
      %p364 = por %p362, %p363
      %p365 = scmp.le.s32.totalorder 1, %s32
      %p366 = scmp.lt.s32.totalorder %s32, 33
      %p367 = pnand %p365, %p366
      %p368 = pneg %p367
      // Predicated region
      $region9: #{tpu_custom_call.1} parent=5 // pred_check
        _
      $region10: #{tpu_custom_call.1} parent=5 // pred_check_branch
        %370 = sbr.rel (%p367) target = $region12
      $region11: #{tpu_custom_call.1} parent=5 // pred_region
        %s371 = ssub.s32 %s32, 1
        // Predicated region
        $region13: #{tpu_custom_call.1} parent=11 // pred_check
          %p372 = pneg %p79
        $region14: #{tpu_custom_call.1} parent=11 // pred_check_branch
          %374 = sbr.rel (%p372) target = $region16
        $region15: #{tpu_custom_call.1} parent=11 // pred_region
          %s376 = ssub.s32 2048, 2048
          %377 = vsyncadd [#allocation6], %s376
          %s378 = sshll.u32 [#allocation5], 4
          %s379 = int_to_ptr.vmem [resolvable:$true] %s378
          %384 = dma.hbm_to_vmem [thread:$0]  %s1, 2048, %s379, [#allocation6], 128, 128, 8
        $region16: #{tpu_custom_call.1} parent=11 // pred_fallthru
          _
        // Predicated region
        $region17: #{tpu_custom_call.1} parent=11 // pred_check
          %p385 = pneg %p100
        $region18: #{tpu_custom_call.1} parent=11 // pred_check_branch
          %387 = sbr.rel (%p385) target = $region20
        $region19: #{tpu_custom_call.1} parent=11 // pred_region
          %s389 = ssub.s32 2048, 2048
          %390 = vsyncadd [#allocation6], %s389
          %s391 = sshll.u32 [#allocation7], 4
          %s392 = int_to_ptr.vmem [resolvable:$true] %s391
          %397 = dma.hbm_to_vmem [thread:$0]  %s2, 2048, %s392, [#allocation6], 128, 128, 8
        $region20: #{tpu_custom_call.1} parent=11 // pred_fallthru
          _
        // Predicated region
        $region21: #{tpu_custom_call.1} parent=11 // pred_check
          %p398 = pneg %p121
        $region22: #{tpu_custom_call.1} parent=11 // pred_check_branch
          %400 = sbr.rel (%p398) target = $region24
        $region23: #{tpu_custom_call.1} parent=11 // pred_region
          _
        $region24: #{tpu_custom_call.1} parent=11 // pred_fallthru
          _
        // Predicated region
        $region25: #{tpu_custom_call.1} parent=11 // pred_check
          %p401 = pneg %p142
        $region26: #{tpu_custom_call.1} parent=11 // pred_check_branch
          %403 = sbr.rel (%p401) target = $region28
        $region27: #{tpu_custom_call.1} parent=11 // pred_region
          _
        $region28: #{tpu_custom_call.1} parent=11 // pred_fallthru
          _
        // Predicated region
        $region29: #{tpu_custom_call.1} parent=11 // pred_check
          %p404 = pneg %p163
        $region30: #{tpu_custom_call.1} parent=11 // pred_check_branch
          %406 = sbr.rel (%p404) target = $region32
        $region31: #{tpu_custom_call.1} parent=11 // pred_region
          _
        $region32: #{tpu_custom_call.1} parent=11 // pred_fallthru
          _
        // Predicated region
        $region33: #{tpu_custom_call.1} parent=11 // pred_check
          %p407 = pneg %p184
        $region34: #{tpu_custom_call.1} parent=11 // pred_check_branch
          %409 = sbr.rel (%p407) target = $region36
        $region35: #{tpu_custom_call.1} parent=11 // pred_region
          %s411 = ssub.s32 128, 128
          %412 = vsyncadd [#allocation9], %s411
          %s414 = sshll.u32 [#allocation8], 4
          %s415 = int_to_ptr.vmem [resolvable:$true] %s414
          %417 = dma.hbm_to_vmem [thread:$0]  %s6, 128, %s415, [#allocation9]
        $region36: #{tpu_custom_call.1} parent=11 // pred_fallthru
          _
        // Predicated region
        $region37: #{tpu_custom_call.1} parent=11 // pred_check
          %p418 = pneg %p205
        $region38: #{tpu_custom_call.1} parent=11 // pred_check_branch
          %420 = sbr.rel (%p418) target = $region40
        $region39: #{tpu_custom_call.1} parent=11 // pred_region
          _
        $region40: #{tpu_custom_call.1} parent=11 // pred_fallthru
          _
        // Predicated region
        $region41: #{tpu_custom_call.1} parent=11 // pred_check
          %p421 = pneg %p226
        $region42: #{tpu_custom_call.1} parent=11 // pred_check_branch
          %423 = sbr.rel (%p421) target = $region44
        $region43: #{tpu_custom_call.1} parent=11 // pred_region
          %s425 = ssub.s32 128, 128
          %426 = vsyncadd [#allocation9], %s425
          %s428 = sshll.u32 [#allocation10], 4
          %s429 = int_to_ptr.vmem [resolvable:$true] %s428
          %431 = dma.hbm_to_vmem [thread:$0]  %s8, 128, %s429, [#allocation9]
        $region44: #{tpu_custom_call.1} parent=11 // pred_fallthru
          _
      $region12: #{tpu_custom_call.1} parent=5 // pred_fallthru
        _
      %p432 = scmp.lt.s32.totalorder %s32, 32
      // Predicated region
      $region45: #{tpu_custom_call.1} parent=5 // pred_check
        %p433 = pneg %p432
      $region46: #{tpu_custom_call.1} parent=5 // pred_check_branch
        %435 = sbr.rel (%p433) target = $region48
      $region47: #{tpu_custom_call.1} parent=5 // pred_region
        // Predicated region
        $region49: #{tpu_custom_call.1} parent=47 // pred_check
          %p436 = pneg %p52
        $region50: #{tpu_custom_call.1} parent=47 // pred_check_branch
          %438 = sbr.rel (%p436) target = $region52
        $region51: #{tpu_custom_call.1} parent=47 // pred_region
          %s439 = sand.u32 %s42, 1
          %s440 = scalar_lea.sflag [#allocation3], %s439
          %s441 = sand.u32 %s42, 1
          %s442 = smul.addr %s441, 8
          %s443 = scalar_lea.vmem [#allocation2], %s442
          %s445 = ssub.s32 128, 128
          %446 = vsyncadd %s440, %s445
          %s447 = smul.addr %s32, 128
          %s448 = scalar_lea.hbm %s0, %s447
          %s450 = sshll.u32 %s443, 4
          %s451 = int_to_ptr.vmem [resolvable:$true] %s450
          %453 = dma.hbm_to_vmem [thread:$0]  %s448, 128, %s451, %s440
        $region52: #{tpu_custom_call.1} parent=47 // pred_fallthru
          _
      $region48: #{tpu_custom_call.1} parent=5 // pred_fallthru
        _
      %p454 = scmp.le.s32.totalorder 1, %s32
      %p455 = scmp.lt.s32.totalorder %s32, 33
      %p456 = pnand %p454, %p455
      %p457 = pneg %p456
      // Predicated region
      $region53: #{tpu_custom_call.1} parent=5 // pred_check
        _
      $region54: #{tpu_custom_call.1} parent=5 // pred_check_branch
        %459 = sbr.rel (%p456) target = $region56
      $region55: #{tpu_custom_call.1} parent=5 // pred_region
        %s460 = ssub.s32 %s32, 1
        %s461 = sand.u32 %s45, 1
        %s462 = scalar_lea.sflag [#allocation3], %s461
        %s463 = sand.u32 %s45, 1
        %s464 = smul.addr %s463, 8
        %s465 = scalar_lea.vmem [#allocation2], %s464
        // Predicated region
        $region57: #{tpu_custom_call.1} parent=55 // pred_check
          %p466 = pneg %p58
        $region58: #{tpu_custom_call.1} parent=55 // pred_check_branch
          %468 = sbr.rel (%p466) target = $region60
        $region59: #{tpu_custom_call.1} parent=55 // pred_region
          %469 = dma.done %s462, 128
        $region60: #{tpu_custom_call.1} parent=55 // pred_fallthru
          _
        // Predicated region
        $region61: #{tpu_custom_call.1} parent=55 // pred_check
          %p470 = pneg %p79
        $region62: #{tpu_custom_call.1} parent=55 // pred_check_branch
          %472 = sbr.rel (%p470) target = $region64
        $region63: #{tpu_custom_call.1} parent=55 // pred_region
          %473 = dma.done [#allocation6], 2048
        $region64: #{tpu_custom_call.1} parent=55 // pred_fallthru
          _
        // Predicated region
        $region65: #{tpu_custom_call.1} parent=55 // pred_check
          %p474 = pneg %p100
        $region66: #{tpu_custom_call.1} parent=55 // pred_check_branch
          %476 = sbr.rel (%p474) target = $region68
        $region67: #{tpu_custom_call.1} parent=55 // pred_region
          %477 = dma.done [#allocation6], 2048
        $region68: #{tpu_custom_call.1} parent=55 // pred_fallthru
          _
        // Predicated region
        $region69: #{tpu_custom_call.1} parent=55 // pred_check
          %p478 = pneg %p184
        $region70: #{tpu_custom_call.1} parent=55 // pred_check_branch
          %480 = sbr.rel (%p478) target = $region72
        $region71: #{tpu_custom_call.1} parent=55 // pred_region
          %481 = dma.done [#allocation9], 128
        $region72: #{tpu_custom_call.1} parent=55 // pred_fallthru
          _
        // Predicated region
        $region73: #{tpu_custom_call.1} parent=55 // pred_check
          %p482 = pneg %p226
        $region74: #{tpu_custom_call.1} parent=55 // pred_check_branch
          %484 = sbr.rel (%p482) target = $region76
        $region75: #{tpu_custom_call.1} parent=55 // pred_region
          %485 = dma.done [#allocation9], 128
        $region76: #{tpu_custom_call.1} parent=55 // pred_fallthru
          _
        %s486 = sand.u32 %s45, 1
        %s487 = scalar_lea.sflag [#allocation3], %s486
        %s488 = sand.u32 %s45, 1
        %s489 = smul.addr %s488, 8
        %s490 = scalar_lea.vmem [#allocation2], %s489
        %p491 = pneg %p58
        %p492 = pneg %p55
        %p493 = pneg %p79
        %p494 = pneg %p76
        %p495 = pneg %p100
        %p496 = pneg %p97
        %p497 = pneg %p121
        %p498 = pneg %p118
        %p499 = pneg %p142
        %p500 = pneg %p139
        %p501 = pneg %p163
        %p502 = pneg %p160
        %p503 = pneg %p184
        %p504 = pneg %p181
        %p505 = pneg %p205
        %p506 = pneg %p202
        %p507 = pneg %p226
        %p508 = pneg %p223
        %p509 = pneg %p252
        %p510 = pneg %p249
        %s511 = sand.u32 %s239, 1
        %s512 = scalar_lea.sflag [#allocation4], %s511
        %s513 = sand.u32 %s239, 1
        %s514 = smul.addr %s513, 8
        %s515 = scalar_lea.vmem [#allocation11], %s514
        %p516 = pneg %p273
        %p517 = pneg %p270
        %p518 = pneg %p294
        %p519 = pneg %p291
        %p520 = pneg %p315
        %p521 = pneg %p312
        %p522 = pneg %p336
        %p523 = pneg %p333
        %p524 = pneg %p357
        %p525 = pneg %p354
        %p526 = scmp.eq.s32.totalorder %s37, 0
        // Predicated region
        $region77: #{tpu_custom_call.1} parent=55 // pred_check
          %p527 = pneg %p526
        $region78: #{tpu_custom_call.1} parent=55 // pred_check_branch
          %529 = sbr.rel (%p527) target = $region80
        $region79: #{tpu_custom_call.1} parent=55 // pred_region
          %v530 = vld [vmem:[%s4] sm:$0xff]
          %531 = vst [vmem:[#allocation12] sm:$0xff] %v530
          %v532 = vld [vmem:[%s5] sm:$0xff]
          %533 = vst [vmem:[#allocation14] sm:$0xff] %v532
          %v534 = vld [vmem:[#allocation8] sm:$0xff]
          %535 = vst [vmem:[#allocation15] sm:$0xff] %v534
          %v536 = vld [vmem:[%s7] sm:$0xff]
          %537 = vst [vmem:[#allocation17] sm:$0xff] %v536
          %v538 = vld [vmem:[#allocation10] sm:$0xff]
          %539 = vst [vmem:[#allocation18] sm:$0xff] %v538
        $region80: #{tpu_custom_call.1} parent=55 // pred_fallthru
          _
        %v540 = vld [vmem:[%s465] sm:$0xff]
        %v541 = vld [vmem:[#allocation17] sm:$0xff]
        %v542 = vld [vmem:[#allocation5] sm:$0xff]
        %v543 = vld [vmem:[#allocation5 + $0x8] sm:$0xff]
        %v544 = vld [vmem:[#allocation5 + $0x10] sm:$0xff]
        %v545 = vld [vmem:[#allocation5 + $0x18] sm:$0xff]
        %v546 = vld [vmem:[#allocation5 + $0x20] sm:$0xff]
        %v547 = vld [vmem:[#allocation5 + $0x28] sm:$0xff]
        %v548 = vld [vmem:[#allocation5 + $0x30] sm:$0xff]
        %v549 = vld [vmem:[#allocation5 + $0x38] sm:$0xff]
        %v550 = vld [vmem:[#allocation5 + $0x40] sm:$0xff]
        %v551 = vld [vmem:[#allocation5 + $0x48] sm:$0xff]
        %v552 = vld [vmem:[#allocation5 + $0x50] sm:$0xff]
        %v553 = vld [vmem:[#allocation5 + $0x58] sm:$0xff]
        %v554 = vld [vmem:[#allocation5 + $0x60] sm:$0xff]
        %v555 = vld [vmem:[#allocation5 + $0x68] sm:$0xff]
        %v556 = vld [vmem:[#allocation5 + $0x70] sm:$0xff]
        %v557 = vld [vmem:[#allocation5 + $0x78] sm:$0xff]
        %558 = vmatprep.subr.mxu0 0.0
        %559 = vmatpush1.msra.mxu0 %v542
        %560 = vmatprep.subr.mxu0 0.0
        %561 = vmatpush1.msra.mxu0 %v543
        %562 = vmatprep.subr.mxu0 0.0
        %563 = vmatpush1.msra.mxu0 %v544
        %564 = vmatprep.subr.mxu0 0.0
        %565 = vmatpush1.msra.mxu0 %v545
        %566 = vmatprep.subr.mxu0 0.0
        %567 = vmatpush1.msra.mxu0 %v546
        %568 = vmatprep.subr.mxu0 0.0
        %569 = vmatpush1.msra.mxu0 %v547
        %570 = vmatprep.subr.mxu0 0.0
        %571 = vmatpush1.msra.mxu0 %v548
        %572 = vmatprep.subr.mxu0 0.0
        %573 = vmatpush1.msra.mxu0 %v549
        %574 = vmatprep.subr.mxu0 0.0
        %575 = vmatpush1.msra.mxu0 %v550
        %576 = vmatprep.subr.mxu0 0.0
        %577 = vmatpush1.msra.mxu0 %v551
        %578 = vmatprep.subr.mxu0 0.0
        %579 = vmatpush1.msra.mxu0 %v552
        %580 = vmatprep.subr.mxu0 0.0
        %581 = vmatpush1.msra.mxu0 %v553
        %582 = vmatprep.subr.mxu0 0.0
        %583 = vmatpush1.msra.mxu0 %v554
        %584 = vmatprep.subr.mxu0 0.0
        %585 = vmatpush1.msra.mxu0 %v555
        %586 = vmatprep.subr.mxu0 0.0
        %587 = vmatpush1.msra.mxu0 %v556
        %588 = vmatprep.subr.mxu0 0.0
        %589 = vmatpush1.msra.mxu0 %v557
        %590 = vmatprep.subr.mxu0 0.0
        %591 = vmatpush1.msra.mxu0 0.0
        %592 = vmatprep.subr.mxu0 0.0
        %593 = vmatpush1.msra.mxu0 0.0
        %594 = vmatprep.subr.mxu0 0.0
        %595 = vmatpush1.msra.mxu0 0.0
        %596 = vmatprep.subr.mxu0 0.0
        %597 = vmatpush1.msra.mxu0 0.0
        %598 = vmatprep.subr.mxu0 0.0
        %599 = vmatpush1.msra.mxu0 0.0
        %600 = vmatprep.subr.mxu0 0.0
        %601 = vmatpush1.msra.mxu0 0.0
        %602 = vmatprep.subr.mxu0 0.0
        %603 = vmatpush1.msra.mxu0 0.0
        %604 = vmatprep.subr.mxu0 0.0
        %605 = vmatpush1.msra.mxu0 0.0
        %606 = vmatprep.subr.mxu0 0.0
        %607 = vmatpush1.msra.mxu0 0.0
        %608 = vmatprep.subr.mxu0 0.0
        %609 = vmatpush1.msra.mxu0 0.0
        %610 = vmatprep.subr.mxu0 0.0
        %611 = vmatpush1.msra.mxu0 0.0
        %612 = vmatprep.subr.mxu0 0.0
        %613 = vmatpush1.msra.mxu0 0.0
        %614 = vmatprep.subr.mxu0 0.0
        %615 = vmatpush1.msra.mxu0 0.0
        %616 = vmatprep.subr.mxu0 0.0
        %617 = vmatpush1.msra.mxu0 0.0
        %618 = vmatprep.subr.mxu0 0.0
        %619 = vmatpush1.msra.mxu0 0.0
        %620 = vmatprep.subr.mxu0 0.0
        %621 = vmatpush1.msra.mxu0 0.0
        %622 = vmatprep.mubr.f32.mxu0 0.0
        %623 = vmatmul.mubr.f32.gmra.mrb[0].mxu0 %v540
        %v624 = vpop.f32.mrb[0].mxu0
        %v625 = vadd.f32 0.0, %v624
        %v626 = vpop.f32.mrb[0].mxu0
        %627 = vdwg.mxu0
        %v628 = vld [vmem:[#allocation7] sm:$0xff]
        %v629 = vld [vmem:[#allocation7 + $0x8] sm:$0xff]
        %v630 = vld [vmem:[#allocation7 + $0x10] sm:$0xff]
        %v631 = vld [vmem:[#allocation7 + $0x18] sm:$0xff]
        %v632 = vld [vmem:[#allocation7 + $0x20] sm:$0xff]
        %v633 = vld [vmem:[#allocation7 + $0x28] sm:$0xff]
        %v634 = vld [vmem:[#allocation7 + $0x30] sm:$0xff]
        %v635 = vld [vmem:[#allocation7 + $0x38] sm:$0xff]
        %v636 = vld [vmem:[#allocation7 + $0x40] sm:$0xff]
        %v637 = vld [vmem:[#allocation7 + $0x48] sm:$0xff]
        %v638 = vld [vmem:[#allocation7 + $0x50] sm:$0xff]
        %v639 = vld [vmem:[#allocation7 + $0x58] sm:$0xff]
        %v640 = vld [vmem:[#allocation7 + $0x60] sm:$0xff]
        %v641 = vld [vmem:[#allocation7 + $0x68] sm:$0xff]
        %v642 = vld [vmem:[#allocation7 + $0x70] sm:$0xff]
        %v643 = vld [vmem:[#allocation7 + $0x78] sm:$0xff]
        %644 = vmatprep.subr.mxu0 0.0
        %645 = vmatpush1.msra.mxu0 %v628
        %646 = vmatprep.subr.mxu0 0.0
        %647 = vmatpush1.msra.mxu0 %v629
        %648 = vmatprep.subr.mxu0 0.0
        %649 = vmatpush1.msra.mxu0 %v630
        %650 = vmatprep.subr.mxu0 0.0
        %651 = vmatpush1.msra.mxu0 %v631
        %652 = vmatprep.subr.mxu0 0.0
        %653 = vmatpush1.msra.mxu0 %v632
        %654 = vmatprep.subr.mxu0 0.0
        %655 = vmatpush1.msra.mxu0 %v633
        %656 = vmatprep.subr.mxu0 0.0
        %657 = vmatpush1.msra.mxu0 %v634
        %658 = vmatprep.subr.mxu0 0.0
        %659 = vmatpush1.msra.mxu0 %v635
        %660 = vmatprep.subr.mxu0 0.0
        %661 = vmatpush1.msra.mxu0 %v636
        %662 = vmatprep.subr.mxu0 0.0
        %663 = vmatpush1.msra.mxu0 %v637
        %664 = vmatprep.subr.mxu0 0.0
        %665 = vmatpush1.msra.mxu0 %v638
        %666 = vmatprep.subr.mxu0 0.0
        %667 = vmatpush1.msra.mxu0 %v639
        %668 = vmatprep.subr.mxu0 0.0
        %669 = vmatpush1.msra.mxu0 %v640
        %670 = vmatprep.subr.mxu0 0.0
        %671 = vmatpush1.msra.mxu0 %v641
        %672 = vmatprep.subr.mxu0 0.0
        %673 = vmatpush1.msra.mxu0 %v642
        %674 = vmatprep.subr.mxu0 0.0
        %675 = vmatpush1.msra.mxu0 %v643
        %676 = vmatprep.subr.mxu0 0.0
        %677 = vmatpush1.msra.mxu0 0.0
        %678 = vmatprep.subr.mxu0 0.0
        %679 = vmatpush1.msra.mxu0 0.0
        %680 = vmatprep.subr.mxu0 0.0
        %681 = vmatpush1.msra.mxu0 0.0
        %682 = vmatprep.subr.mxu0 0.0
        %683 = vmatpush1.msra.mxu0 0.0
        %684 = vmatprep.subr.mxu0 0.0
        %685 = vmatpush1.msra.mxu0 0.0
        %686 = vmatprep.subr.mxu0 0.0
        %687 = vmatpush1.msra.mxu0 0.0
        %688 = vmatprep.subr.mxu0 0.0
        %689 = vmatpush1.msra.mxu0 0.0
        %690 = vmatprep.subr.mxu0 0.0
        %691 = vmatpush1.msra.mxu0 0.0
        %692 = vmatprep.subr.mxu0 0.0
        %693 = vmatpush1.msra.mxu0 0.0
        %694 = vmatprep.subr.mxu0 0.0
        %695 = vmatpush1.msra.mxu0 0.0
        %696 = vmatprep.subr.mxu0 0.0
        %697 = vmatpush1.msra.mxu0 0.0
        %698 = vmatprep.subr.mxu0 0.0
        %699 = vmatpush1.msra.mxu0 0.0
        %700 = vmatprep.subr.mxu0 0.0
        %701 = vmatpush1.msra.mxu0 0.0
        %702 = vmatprep.subr.mxu0 0.0
        %703 = vmatpush1.msra.mxu0 0.0
        %704 = vmatprep.subr.mxu0 0.0
        %705 = vmatpush1.msra.mxu0 0.0
        %706 = vmatprep.subr.mxu0 0.0
        %707 = vmatpush1.msra.mxu0 0.0
        %708 = vmatprep.mubr.f32.mxu0 0.0
        %709 = vmatmul.mubr.f32.gmra.mrb[0].mxu0 %v541
        %v710 = vpop.f32.mrb[0].mxu0
        %v711 = vadd.f32 0.0, %v710
        %v712 = vpop.f32.mrb[0].mxu0
        %713 = vdwg.mxu0
        %v714 = vld [vmem:[#allocation14] sm:$0xff]
        %v715 = vmul.f32 %v714, 0.9
        %v716 = vadd.f32 %v715, %v625
        %v717 = vld [vmem:[#allocation15] sm:$0xff]
        %v718 = vmul.f32 %v717, 0.9
        %v719 = vadd.f32 %v718, %v711
        %v720 = vld [vmem:[#allocation12] sm:$0xff]
        %v721 = vmul.f32 %v720, 0.95
        %v722 = vadd.f32 %v716, %v719
        %v723 = vld [vmem:[%s3] sm:$0x1]
        %v725 = vlaneseq
        %v726 = vshrl.u32 %v725, 7
        %v727 = vsub.s32 0, %v726
        %v728 = vrot.slane %v723, %v727
        %v730 = vadd.f32 %v722, %v728
        %v731 = vmul.f32 %v730, 0.001
        %v732 = vadd.f32 %v721, %v731
        %v733 = vmax.f32 %v732, 0.0
        %v734 = vsub.f32 %v733, 1.0
        %vm735 = vcmp.gt.f32.partialorder %v734, 0.0
        %v736 = vsel %vm735, 1, 0
        %v737 = vcvt.s32.f32 %v736
        %v738 = vsub.f32 1.0, %v737
        %v739 = vmul.f32 %v737, 2.0
        %v740 = vld [vmem:[#allocation18] sm:$0xff]
        %v741 = vsub.f32 %v740, 1.0
        %v742 = vmul.f32 %v738, %v741
        %v743 = vadd.f32 %v739, %v742
        %v744 = vmul.f32 %v738, %v733
        %vm745 = vcmp.le.f32.partialorder %v743, 0.0
        %v746 = vsel %vm745, 1, 0
        %v747 = vcvt.s32.f32 %v746
        %v748 = vmul.f32 %v744, %v747
        %v749 = vmul.f32 %v737, 0.0
        %v750 = vadd.f32 %v748, %v749
        %751 = vst [vmem:[%s515] sm:$0xff] %v737
        %752 = vst [vmem:[#allocation12] sm:$0xff] %v750
        %753 = vst [vmem:[#allocation14] sm:$0xff] %v716
        %754 = vst [vmem:[#allocation15] sm:$0xff] %v719
        %755 = vst [vmem:[#allocation17] sm:$0xff] %v737
        %756 = vst [vmem:[#allocation18] sm:$0xff] %v743
        %s757 = sand.u32 %s239, 1
        %s758 = scalar_lea.sflag [#allocation4], %s757
        %s759 = sand.u32 %s239, 1
        %s760 = smul.addr %s759, 8
        %s761 = scalar_lea.vmem [#allocation11], %s760
        // Predicated region
        $region81: #{tpu_custom_call.1} parent=55 // pred_check
          %p762 = pneg %p249
        $region82: #{tpu_custom_call.1} parent=55 // pred_check_branch
          %764 = sbr.rel (%p762) target = $region84
        $region83: #{tpu_custom_call.1} parent=55 // pred_region
          %s766 = ssub.s32 128, 128
          %767 = vsyncadd %s758, %s766
          %s768 = smul.addr %s37, 128
          %s769 = scalar_lea.hbm %s9, %s768
          %s771 = sshll.u32 %s761, 4
          %s772 = int_to_ptr.vmem [resolvable:$true] %s771
          %774 = dma.vmem_to_hbm [thread:$0]  %s772, 128, %s769, %s758
        $region84: #{tpu_custom_call.1} parent=55 // pred_fallthru
          _
        // Predicated region
        $region85: #{tpu_custom_call.1} parent=55 // pred_check
          %p775 = pneg %p270
        $region86: #{tpu_custom_call.1} parent=55 // pred_check_branch
          %777 = sbr.rel (%p775) target = $region88
        $region87: #{tpu_custom_call.1} parent=55 // pred_region
          %s779 = ssub.s32 128, 128
          %780 = vsyncadd [#allocation13], %s779
          %s782 = sshll.u32 [#allocation12], 4
          %s783 = int_to_ptr.vmem [resolvable:$true] %s782
          %785 = dma.vmem_to_hbm [thread:$0]  %s783, 128, %s10, [#allocation13]
        $region88: #{tpu_custom_call.1} parent=55 // pred_fallthru
          _
        // Predicated region
        $region89: #{tpu_custom_call.1} parent=55 // pred_check
          %p786 = pneg %p291
        $region90: #{tpu_custom_call.1} parent=55 // pred_check_branch
          %788 = sbr.rel (%p786) target = $region92
        $region91: #{tpu_custom_call.1} parent=55 // pred_region
          %s790 = ssub.s32 128, 128
          %791 = vsyncadd [#allocation13], %s790
          %s793 = sshll.u32 [#allocation14], 4
          %s794 = int_to_ptr.vmem [resolvable:$true] %s793
          %796 = dma.vmem_to_hbm [thread:$0]  %s794, 128, %s11, [#allocation13]
        $region92: #{tpu_custom_call.1} parent=55 // pred_fallthru
          _
        // Predicated region
        $region93: #{tpu_custom_call.1} parent=55 // pred_check
          %p797 = pneg %p312
        $region94: #{tpu_custom_call.1} parent=55 // pred_check_branch
          %799 = sbr.rel (%p797) target = $region96
        $region95: #{tpu_custom_call.1} parent=55 // pred_region
          %s801 = ssub.s32 128, 128
          %802 = vsyncadd [#allocation16], %s801
          %s804 = sshll.u32 [#allocation15], 4
          %s805 = int_to_ptr.vmem [resolvable:$true] %s804
          %807 = dma.vmem_to_hbm [thread:$0]  %s805, 128, %s12, [#allocation16]
        $region96: #{tpu_custom_call.1} parent=55 // pred_fallthru
          _
        // Predicated region
        $region97: #{tpu_custom_call.1} parent=55 // pred_check
          %p808 = pneg %p333
        $region98: #{tpu_custom_call.1} parent=55 // pred_check_branch
          %810 = sbr.rel (%p808) target = $region100
        $region99: #{tpu_custom_call.1} parent=55 // pred_region
          %s812 = ssub.s32 128, 128
          %813 = vsyncadd [#allocation16], %s812
          %s815 = sshll.u32 [#allocation17], 4
          %s816 = int_to_ptr.vmem [resolvable:$true] %s815
          %818 = dma.vmem_to_hbm [thread:$0]  %s816, 128, %s13, [#allocation16]
        $region100: #{tpu_custom_call.1} parent=55 // pred_fallthru
          _
        // Predicated region
        $region101: #{tpu_custom_call.1} parent=55 // pred_check
          %p819 = pneg %p354
        $region102: #{tpu_custom_call.1} parent=55 // pred_check_branch
          %821 = sbr.rel (%p819) target = $region104
        $region103: #{tpu_custom_call.1} parent=55 // pred_region
          %s823 = ssub.s32 128, 128
          %824 = vsyncadd [#allocation19], %s823
          %s826 = sshll.u32 [#allocation18], 4
          %s827 = int_to_ptr.vmem [resolvable:$true] %s826
          %829 = dma.vmem_to_hbm [thread:$0]  %s827, 128, %s14, [#allocation19]
        $region104: #{tpu_custom_call.1} parent=55 // pred_fallthru
          _
        // Predicated region
        $region105: #{tpu_custom_call.1} parent=55 // pred_check
          %p830 = pneg %p270
        $region106: #{tpu_custom_call.1} parent=55 // pred_check_branch
          %832 = sbr.rel (%p830) target = $region108
        $region107: #{tpu_custom_call.1} parent=55 // pred_region
          %833 = dma.done [#allocation13], 128
        $region108: #{tpu_custom_call.1} parent=55 // pred_fallthru
          _
        // Predicated region
        $region109: #{tpu_custom_call.1} parent=55 // pred_check
          %p834 = pneg %p291
        $region110: #{tpu_custom_call.1} parent=55 // pred_check_branch
          %836 = sbr.rel (%p834) target = $region112
        $region111: #{tpu_custom_call.1} parent=55 // pred_region
          %837 = dma.done [#allocation13], 128
        $region112: #{tpu_custom_call.1} parent=55 // pred_fallthru
          _
        // Predicated region
        $region113: #{tpu_custom_call.1} parent=55 // pred_check
          %p838 = pneg %p312
        $region114: #{tpu_custom_call.1} parent=55 // pred_check_branch
          %840 = sbr.rel (%p838) target = $region116
        $region115: #{tpu_custom_call.1} parent=55 // pred_region
          %841 = dma.done [#allocation16], 128
        $region116: #{tpu_custom_call.1} parent=55 // pred_fallthru
          _
        // Predicated region
        $region117: #{tpu_custom_call.1} parent=55 // pred_check
          %p842 = pneg %p333
        $region118: #{tpu_custom_call.1} parent=55 // pred_check_branch
          %844 = sbr.rel (%p842) target = $region120
        $region119: #{tpu_custom_call.1} parent=55 // pred_region
          %845 = dma.done [#allocation16], 128
        $region120: #{tpu_custom_call.1} parent=55 // pred_fallthru
          _
        // Predicated region
        $region121: #{tpu_custom_call.1} parent=55 // pred_check
          %p846 = pneg %p354
        $region122: #{tpu_custom_call.1} parent=55 // pred_check_branch
          %848 = sbr.rel (%p846) target = $region124
        $region123: #{tpu_custom_call.1} parent=55 // pred_region
          %849 = dma.done [#allocation19], 128
        $region124: #{tpu_custom_call.1} parent=55 // pred_fallthru
          _
      $region56: #{tpu_custom_call.1} parent=5 // pred_fallthru
        _
      %p850 = scmp.le.s32.totalorder 2, %s32
      // Predicated region
      $region125: #{tpu_custom_call.1} parent=5 // pred_check
        %p851 = pneg %p850
      $region126: #{tpu_custom_call.1} parent=5 // pred_check_branch
        %853 = sbr.rel (%p851) target = $region128
      $region127: #{tpu_custom_call.1} parent=5 // pred_region
        %s854 = ssub.s32 %s32, 2
        // Predicated region
        $region129: #{tpu_custom_call.1} parent=127 // pred_check
          %p855 = pneg %p255
        $region130: #{tpu_custom_call.1} parent=127 // pred_check_branch
          %857 = sbr.rel (%p855) target = $region132
        $region131: #{tpu_custom_call.1} parent=127 // pred_region
          %s858 = sand.u32 %s240, 1
          %s859 = scalar_lea.sflag [#allocation4], %s858
          %s860 = sand.u32 %s240, 1
          %s861 = smul.addr %s860, 8
          %s862 = scalar_lea.vmem [#allocation11], %s861
          %863 = dma.done %s859, 128
        $region132: #{tpu_custom_call.1} parent=127 // pred_fallthru
          _
      $region128: #{tpu_custom_call.1} parent=5 // pred_fallthru
        _
    $region6: #{tpu_custom_call.1} parent=1 // loop_footer
      %s36 = sadd.s32 1, %s32
    $region7: #{tpu_custom_call.1} parent=1 // loop_footer_branch
      %31 = sbr.rel target = $region3
    $region8: #{tpu_custom_call.1} parent=1 // loop_exit
      _
    %864 = vsyncpa [#allocation3], 1
    %s865 = scalar_lea.sflag [#allocation3], 1
    %866 = vsyncpa %s865, 1
    %867 = vsyncpa [#allocation6], 1
    %868 = vsyncpa [#allocation9], 1
    %869 = vsyncpa [#allocation4], 1
    %s870 = scalar_lea.sflag [#allocation4], 1
    %871 = vsyncpa %s870, 1
    %872 = vsyncpa [#allocation13], 1
    %873 = vsyncpa [#allocation16], 1
    %874 = vsyncpa [#allocation19], 1

</llo_original>
